<compile_context>
chip_gen: v6e
topology: v6e:2x2x1
jax: 0.10.0
libtpu: 0.0.40
codegen_flags: <defaults>
</compile_context>

<pallas_src>
from functools import partial

import jax
import jax.numpy as jnp
from jax import lax
from jax.experimental import pallas as pl
from jax.experimental.pallas import tpu as pltpu


def _round_up(x, m):
    return (x + m - 1) // m * m


def _stage_kernel(x_ref, w_ref, b_ref, out_ref, pad_ref, im2col_ref,
                  *, H, W, C, nblocks, h):
    """Fused ResNet stage for one batch element.

    x_ref      : (1, C, H*W)       channels on sublanes, flat spatial on lanes
    w_ref      : (nblocks, C, 9*C) packed conv2 weights: w[blk, o, (dy*3+dx)*C + i]
    b_ref      : (nblocks, C, 1)   conv2 biases
    out_ref    : (1, C, H*W)
    pad_ref    : (C, GUARD+P+GUARD) VMEM scratch with zero guard bands on each side
    im2col_ref : (9*C, P)          VMEM scratch holding the 9 stacked shifted taps
    """
    HW = H * W
    P = _round_up((H + 2) * W, 128)   # padded frame: H padded by 1 row top/bottom,
    GUARD = 128                       # flattened to lanes, rounded up to 128
    BASE = GUARD

    # ---- build the zero-padded state inside the kernel (no jnp.pad outside) ----
    pad_ref[...] = jnp.zeros_like(pad_ref)
    pad_ref[:, BASE:BASE + HW] = x_ref[0]              # 128-aligned lane store
    # padded-frame index p = (y + 1) * W + x ; rows 0 and H+1 plus the tail are zero
    xp = pad_ref[:, BASE - W:BASE - W + P]             # (C, P) initial padded state

    # ---- lane-index masks, computed once ----
    idx = lax.broadcasted_iota(jnp.int32, (C, P), 1)
    col = idx % W
    not_left = (col != 0).astype(jnp.float32)          # kills left-border wrap taps
    not_right = (col != W - 1).astype(jnp.float32)     # kills right-border wrap taps
    interior = ((idx >= W) & (idx < W + HW)).astype(jnp.float32)

    # ---- both residual blocks, fully fused ----
    for blk in range(nblocks):
        # relu(x); the zero pads stay zero.  Stored once into the guarded scratch
        # so every tap below is a cheap lane-offset window of one padded buffer.
        pad_ref[:, BASE:BASE + P] = jnp.maximum(xp, 0.0)

        for dy in range(3):
            for dx in range(3):
                off = (dy - 1) * W + (dx - 1)
                tap = pad_ref[:, BASE + off:BASE + off + P]   # (C, P) shifted view
                if dx == 0:
                    tap = tap * not_left
                elif dx == 2:
                    tap = tap * not_right
                t = dy * 3 + dx
                im2col_ref[t * C:(t + 1) * C, :] = tap

        # one MXU matmul per block: (C, 9C) x (9C, P) -> (C, P)
        z = jnp.dot(w_ref[blk], im2col_ref[...],
                    preferred_element_type=jnp.float32)
        z = z + b_ref[blk]                                    # (C, 1) lane broadcast
        # residual step; re-zero pad rows / tail so the next block reads clean pads
        xp = (xp + h * z) * interior

    out_ref[0] = xp[:, W:W + HW].astype(out_ref.dtype)


def prepare_params(params):
    """One-time parameter repack (hoisted out of the forward pass).

    Returns
      w_packed: (nblocks, C, 9*C)  w_packed[blk, o, (dy*3+dx)*C + i] = cv2_w[o, i, dy, dx]
      b_packed: (nblocks, C, 1)
    cv1 parameters are dead code in the forward pass and are not packed.
    """
    w_list, b_list = [], []
    for blk in params:
        w = blk["cv2_w"]                                  # OIHW (C, C, 3, 3)
        c_out, c_in = w.shape[0], w.shape[1]
        w_list.append(jnp.transpose(w, (0, 2, 3, 1)).reshape(c_out, 9 * c_in))
        b_list.append(blk["cv2_b"].reshape(c_out, 1))
    return jnp.stack(w_list, axis=0), jnp.stack(b_list, axis=0)


def resnet_stage_forward(x_nchw, w_packed, b_packed, h):
    """ResNetStage.forward: all blocks fused into one Pallas call."""
    N, C, H, W = x_nchw.shape
    nblocks = w_packed.shape[0]
    HW = H * W
    P = _round_up((H + 2) * W, 128)
    GP = 128 + P + 128

    x2 = x_nchw.reshape(N, C, HW)     # NCHW -> (N, C, H*W): lane dense, no transpose

    kern = partial(_stage_kernel, H=H, W=W, C=C, nblocks=nblocks, h=float(h))

    flops = int(N * nblocks * (2 * C * (9 * C) * P + 8 * C * P))
    bytes_accessed = int(4 * (2 * N * C * HW + nblocks * (9 * C * C + C)))

    y = pl.pallas_call(
        kern,
        out_shape=jax.ShapeDtypeStruct((N, C, HW), jnp.float32),
        grid_spec=pltpu.PrefetchScalarGridSpec(
            num_scalar_prefetch=0,
            grid=(N,),
            in_specs=[
                pl.BlockSpec((1, C, HW), lambda n: (n, 0, 0)),
                pl.BlockSpec((nblocks, C, 9 * C), lambda n: (0, 0, 0)),
                pl.BlockSpec((nblocks, C, 1), lambda n: (0, 0, 0)),
            ],
            out_specs=pl.BlockSpec((1, C, HW), lambda n: (n, 0, 0)),
            scratch_shapes=[
                pltpu.VMEM((C, GP), jnp.float32),        # guarded padded buffer
                pltpu.VMEM((9 * C, P), jnp.float32),     # im2col stack
            ],
        ),
        compiler_params=pltpu.CompilerParams(
            dimension_semantics=("parallel",)),
        cost_estimate=pl.CostEstimate(
            flops=flops, transcendentals=0, bytes_accessed=bytes_accessed),
    )(x2, w_packed, b_packed)

    return y.reshape(N, C, H, W)


def resnet_stage_reference(x_nchw, params, h):
    """Pure-JAX reference (lax conv) for correctness checking."""
    x = jnp.transpose(x_nchw, (0, 2, 3, 1))
    dn = lax.conv_dimension_numbers(x.shape, (3, 3, x.shape[-1], x.shape[-1]),
                                    ("NHWC", "HWIO", "NHWC"))
    for blk in params:
        w_hwio = jnp.transpose(blk["cv2_w"], (2, 3, 1, 0))
        z = lax.conv_general_dilated(jnp.maximum(x, 0.0), w_hwio,
                                     window_strides=(1, 1), padding="SAME",
                                     dimension_numbers=dn)
        z = z + blk["cv2_b"][None, None, None, :]
        x = x + h * z
    return jnp.transpose(x, (0, 3, 1, 2))


def init_params(key, nblocks, nfilters):
    """Deterministic synthetic parameters matching the PyTorch __init__ shapes."""
    params = []
    for _ in range(nblocks):
        key, k1, k2, k3, k4 = jax.random.split(key, 5)
        params.append({
            # cv1 params exist (as in __init__) but are unused in the forward pass.
            "cv1_w": 0.1 * jax.random.normal(k1, (nfilters, nfilters, 3, 3), jnp.float32),
            "cv1_b": 0.1 * jax.random.normal(k2, (nfilters,), jnp.float32),
            "cv2_w": 0.1 * jax.random.normal(k3, (nfilters, nfilters, 3, 3), jnp.float32),
            "cv2_b": 0.1 * jax.random.normal(k4, (nfilters,), jnp.float32),
        })
    return params


if __name__ == "__main__":
    nblocks, nfilters = 2, 4
    batchnorm, bias, smallstep = False, True, True
    h = 1.0 / nblocks if smallstep else 1.0

    key = jax.random.PRNGKey(0)
    key, kx = jax.random.split(key)
    x = jax.random.normal(kx, (2, nfilters, 16, 16), jnp.float32)   # NCHW like PyTorch
    params = init_params(key, nblocks, nfilters)

    # one-time parameter prep (hoisted out of the forward)
    w_packed, b_packed = prepare_params(params)

    fwd = jax.jit(partial(resnet_stage_forward, h=h))
    y = fwd(x, w_packed, b_packed)
    jax.block_until_ready(y)
    assert y.shape == x.shape and y.dtype == jnp.float32

    y_ref = resnet_stage_reference(x, params, h)
    assert jnp.allclose(y, y_ref, rtol=1e-4, atol=1e-5), "mismatch vs JAX reference"

    print("KERNEL_OK")
</pallas_src>

<mosaic_0001>
module attributes {stable_mosaic.version = 11 : i64} {
  func.func @_stage_kernel(%arg0: i32, %arg1: memref<1x4x256xf32, #tpu.memory_space<vmem>>, %arg2: memref<2x4x36xf32, #tpu.memory_space<vmem>>, %arg3: memref<2x4x1xf32, #tpu.memory_space<vmem>>, %arg4: memref<1x4x256xf32, #tpu.memory_space<vmem>>, %arg5: memref<4x640xf32, #tpu.memory_space<vmem>>, %arg6: memref<36x384xf32, #tpu.memory_space<vmem>>) attributes {dimension_semantics = [#tpu.dimension_semantics<parallel>], iteration_bounds = array<i64: 2>, scalar_prefetch = 0 : i64, scratch_operands = 2 : i64, tpu.core_type = #tpu.core_type<tc>, window_params = [{transform_indices = @transform_0, window_bounds = array<i64: 1, 4, 256>}, {pipeline_mode = #tpu.pipeline_mode<synchronous>, transform_indices = @transform_1, window_bounds = array<i64: 2, 4, 36>}, {pipeline_mode = #tpu.pipeline_mode<synchronous>, transform_indices = @transform_2, window_bounds = array<i64: 2, 4, 1>}, {transform_indices = @transform_3, window_bounds = array<i64: 1, 4, 256>}]} {
    %cst = arith.constant 0.000000e+00 : f32
    %0 = vector.broadcast %cst : f32 to vector<4x640xf32>
    %c0 = arith.constant 0 : index
    %c0_0 = arith.constant 0 : index
    %1 = vector.load %arg5[%c0, %c0_0] : memref<4x640xf32, #tpu.memory_space<vmem>>, vector<4x640xf32>
    tpu.vector_store %arg5[%c0, %c0_0], %0 {strides = array<i32>} : memref<4x640xf32, #tpu.memory_space<vmem>>, vector<4x640xf32>,
    %c0_1 = arith.constant 0 : index
    %c0_2 = arith.constant 0 : index
    %c0_3 = arith.constant 0 : index
    %2 = vector.load %arg1[%c0_1, %c0_2, %c0_3] : memref<1x4x256xf32, #tpu.memory_space<vmem>>, vector<1x4x256xf32>
    %3 = vector.shape_cast %2 : vector<1x4x256xf32> to vector<4x256xf32>
    %c0_4 = arith.constant 0 : index
    %c128 = arith.constant 128 : index
    %4 = vector.load %arg5[%c0_4, %c128] : memref<4x640xf32, #tpu.memory_space<vmem>>, vector<4x256xf32>
    tpu.vector_store %arg5[%c0_4, %c128], %3 {strides = array<i32>} : memref<4x640xf32, #tpu.memory_space<vmem>>, vector<4x256xf32>,
    %c0_5 = arith.constant 0 : index
    %c112 = arith.constant 112 : index
    %5 = vector.load %arg5[%c0_5, %c112] : memref<4x640xf32, #tpu.memory_space<vmem>>, vector<4x384xf32>
    %6 = tpu.iota {dimensions = array<i32: 1>} : vector<4x384xi32>
    %c16_i32 = arith.constant 16 : i32
    %c0_i32 = arith.constant 0 : i32
    %7 = arith.cmpi eq, %c16_i32, %c0_i32 : i32
    %c1_i32 = arith.constant 1 : i32
    %8 = arith.select %7, %c1_i32, %c16_i32 : i32
    %9 = vector.broadcast %8 : i32 to vector<4x384xi32>
    %10 = arith.remsi %6, %9 : vector<4x384xi32>
    %c0_i32_6 = arith.constant 0 : i32
    %11 = vector.broadcast %c0_i32_6 : i32 to vector<4x384xi32>
    %12 = arith.cmpi ne, %10, %11 : vector<4x384xi32>
    %c0_i32_7 = arith.constant 0 : i32
    %13 = vector.broadcast %c0_i32_7 : i32 to vector<4x384xi32>
    %14 = arith.cmpi slt, %10, %13 : vector<4x384xi32>
    %c0_i32_8 = arith.constant 0 : i32
    %15 = arith.cmpi slt, %8, %c0_i32_8 : i32
    %16 = vector.broadcast %15 : i1 to vector<4x384xi1>
    %17 = vector.broadcast %16 : vector<4x384xi1> to vector<4x384xi1>
    %18 = arith.xori %14, %17 : vector<4x384xi1>
    %19 = arith.andi %18, %12 : vector<4x384xi1>
    %20 = vector.broadcast %8 : i32 to vector<4x384xi32>
    %21 = arith.addi %10, %20 : vector<4x384xi32>
    %22 = arith.select %19, %21, %10 : vector<4x384xi1>, vector<4x384xi32>
    %c0_i32_9 = arith.constant 0 : i32
    %23 = vector.broadcast %c0_i32_9 : i32 to vector<4x384xi32>
    %24 = arith.cmpi ne, %22, %23 : vector<4x384xi32>
    %25 = arith.extui %24 : vector<4x384xi1> to vector<4x384xi32>
    %26 = arith.sitofp %25 : vector<4x384xi32> to vector<4x384xf32>
    %c15_i32 = arith.constant 15 : i32
    %27 = vector.broadcast %c15_i32 : i32 to vector<4x384xi32>
    %28 = arith.cmpi ne, %22, %27 : vector<4x384xi32>
    %29 = arith.extui %28 : vector<4x384xi1> to vector<4x384xi32>
    %30 = arith.sitofp %29 : vector<4x384xi32> to vector<4x384xf32>
    %c16_i32_10 = arith.constant 16 : i32
    %31 = vector.broadcast %c16_i32_10 : i32 to vector<4x384xi32>
    %32 = arith.cmpi sge, %6, %31 : vector<4x384xi32>
    %c272_i32 = arith.constant 272 : i32
    %33 = vector.broadcast %c272_i32 : i32 to vector<4x384xi32>
    %34 = arith.cmpi slt, %6, %33 : vector<4x384xi32>
    %35 = arith.andi %32, %34 : vector<4x384xi1>
    %36 = arith.extui %35 : vector<4x384xi1> to vector<4x384xi32>
    %37 = arith.sitofp %36 : vector<4x384xi32> to vector<4x384xf32>
    %cst_11 = arith.constant 0.000000e+00 : f32
    %38 = vector.broadcast %cst_11 : f32 to vector<4x384xf32>
    %39 = arith.maximumf %5, %38 : vector<4x384xf32>
    %c0_12 = arith.constant 0 : index
    %c128_13 = arith.constant 128 : index
    %40 = vector.load %arg5[%c0_12, %c128_13] : memref<4x640xf32, #tpu.memory_space<vmem>>, vector<4x384xf32>
    tpu.vector_store %arg5[%c0_12, %c128_13], %39 {strides = array<i32>} : memref<4x640xf32, #tpu.memory_space<vmem>>, vector<4x384xf32>,
    %c0_14 = arith.constant 0 : index
    %c111 = arith.constant 111 : index
    %41 = vector.load %arg5[%c0_14, %c111] : memref<4x640xf32, #tpu.memory_space<vmem>>, vector<4x384xf32>
    %42 = arith.mulf %41, %26 : vector<4x384xf32>
    %c0_15 = arith.constant 0 : index
    %c0_16 = arith.constant 0 : index
    %43 = vector.load %arg6[%c0_15, %c0_16] : memref<36x384xf32, #tpu.memory_space<vmem>>, vector<4x384xf32>
    tpu.vector_store %arg6[%c0_15, %c0_16], %42 {strides = array<i32>} : memref<36x384xf32, #tpu.memory_space<vmem>>, vector<4x384xf32>,
    %c0_17 = arith.constant 0 : index
    %c112_18 = arith.constant 112 : index
    %44 = vector.load %arg5[%c0_17, %c112_18] : memref<4x640xf32, #tpu.memory_space<vmem>>, vector<4x384xf32>
    %c4 = arith.constant 4 : index
    %c0_19 = arith.constant 0 : index
    %45 = vector.load %arg6[%c4, %c0_19] : memref<36x384xf32, #tpu.memory_space<vmem>>, vector<4x384xf32>
    tpu.vector_store %arg6[%c4, %c0_19], %44 {strides = array<i32>} : memref<36x384xf32, #tpu.memory_space<vmem>>, vector<4x384xf32>,
    %c0_20 = arith.constant 0 : index
    %c113 = arith.constant 113 : index
    %46 = vector.load %arg5[%c0_20, %c113] : memref<4x640xf32, #tpu.memory_space<vmem>>, vector<4x384xf32>
    %47 = arith.mulf %46, %30 : vector<4x384xf32>
    %c8 = arith.constant 8 : index
    %c0_21 = arith.constant 0 : index
    %48 = vector.load %arg6[%c8, %c0_21] : memref<36x384xf32, #tpu.memory_space<vmem>>, vector<4x384xf32>
    tpu.vector_store %arg6[%c8, %c0_21], %47 {strides = array<i32>} : memref<36x384xf32, #tpu.memory_space<vmem>>, vector<4x384xf32>,
    %c0_22 = arith.constant 0 : index
    %c127 = arith.constant 127 : index
    %49 = vector.load %arg5[%c0_22, %c127] : memref<4x640xf32, #tpu.memory_space<vmem>>, vector<4x384xf32>
    %50 = arith.mulf %49, %26 : vector<4x384xf32>
    %c12 = arith.constant 12 : index
    %c0_23 = arith.constant 0 : index
    %51 = vector.load %arg6[%c12, %c0_23] : memref<36x384xf32, #tpu.memory_space<vmem>>, vector<4x384xf32>
    tpu.vector_store %arg6[%c12, %c0_23], %50 {strides = array<i32>} : memref<36x384xf32, #tpu.memory_space<vmem>>, vector<4x384xf32>,
    %c0_24 = arith.constant 0 : index
    %c128_25 = arith.constant 128 : index
    %52 = vector.load %arg5[%c0_24, %c128_25] : memref<4x640xf32, #tpu.memory_space<vmem>>, vector<4x384xf32>
    %c16 = arith.constant 16 : index
    %c0_26 = arith.constant 0 : index
    %53 = vector.load %arg6[%c16, %c0_26] : memref<36x384xf32, #tpu.memory_space<vmem>>, vector<4x384xf32>
    tpu.vector_store %arg6[%c16, %c0_26], %52 {strides = array<i32>} : memref<36x384xf32, #tpu.memory_space<vmem>>, vector<4x384xf32>,
    %c0_27 = arith.constant 0 : index
    %c129 = arith.constant 129 : index
    %54 = vector.load %arg5[%c0_27, %c129] : memref<4x640xf32, #tpu.memory_space<vmem>>, vector<4x384xf32>
    %55 = arith.mulf %54, %30 : vector<4x384xf32>
    %c20 = arith.constant 20 : index
    %c0_28 = arith.constant 0 : index
    %56 = vector.load %arg6[%c20, %c0_28] : memref<36x384xf32, #tpu.memory_space<vmem>>, vector<4x384xf32>
    tpu.vector_store %arg6[%c20, %c0_28], %55 {strides = array<i32>} : memref<36x384xf32, #tpu.memory_space<vmem>>, vector<4x384xf32>,
    %c0_29 = arith.constant 0 : index
    %c143 = arith.constant 143 : index
    %57 = vector.load %arg5[%c0_29, %c143] : memref<4x640xf32, #tpu.memory_space<vmem>>, vector<4x384xf32>
    %58 = arith.mulf %57, %26 : vector<4x384xf32>
    %c24 = arith.constant 24 : index
    %c0_30 = arith.constant 0 : index
    %59 = vector.load %arg6[%c24, %c0_30] : memref<36x384xf32, #tpu.memory_space<vmem>>, vector<4x384xf32>
    tpu.vector_store %arg6[%c24, %c0_30], %58 {strides = array<i32>} : memref<36x384xf32, #tpu.memory_space<vmem>>, vector<4x384xf32>,
    %c0_31 = arith.constant 0 : index
    %c144 = arith.constant 144 : index
    %60 = vector.load %arg5[%c0_31, %c144] : memref<4x640xf32, #tpu.memory_space<vmem>>, vector<4x384xf32>
    %c28 = arith.constant 28 : index
    %c0_32 = arith.constant 0 : index
    %61 = vector.load %arg6[%c28, %c0_32] : memref<36x384xf32, #tpu.memory_space<vmem>>, vector<4x384xf32>
    tpu.vector_store %arg6[%c28, %c0_32], %60 {strides = array<i32>} : memref<36x384xf32, #tpu.memory_space<vmem>>, vector<4x384xf32>,
    %c0_33 = arith.constant 0 : index
    %c145 = arith.constant 145 : index
    %62 = vector.load %arg5[%c0_33, %c145] : memref<4x640xf32, #tpu.memory_space<vmem>>, vector<4x384xf32>
    %63 = arith.mulf %62, %30 : vector<4x384xf32>
    %c32 = arith.constant 32 : index
    %c0_34 = arith.constant 0 : index
    %64 = vector.load %arg6[%c32, %c0_34] : memref<36x384xf32, #tpu.memory_space<vmem>>, vector<4x384xf32>
    tpu.vector_store %arg6[%c32, %c0_34], %63 {strides = array<i32>} : memref<36x384xf32, #tpu.memory_space<vmem>>, vector<4x384xf32>,
    %c0_35 = arith.constant 0 : index
    %c0_36 = arith.constant 0 : index
    %c0_37 = arith.constant 0 : index
    %65 = vector.load %arg2[%c0_35, %c0_36, %c0_37] : memref<2x4x36xf32, #tpu.memory_space<vmem>>, vector<1x4x36xf32>
    %66 = vector.shape_cast %65 : vector<1x4x36xf32> to vector<4x36xf32>
    %c0_38 = arith.constant 0 : index
    %c0_39 = arith.constant 0 : index
    %67 = vector.load %arg6[%c0_38, %c0_39] : memref<36x384xf32, #tpu.memory_space<vmem>>, vector<36x384xf32>
    %cst_40 = arith.constant dense<0.000000e+00> : vector<4x384xf32>
    %68 = tpu.matmul %66, %67, %cst_40 {dimension_numbers = #tpu.dot_dimension_numbers<[1], [0], [0], [1], [0, 0, 1, 1], [], []>} : vector<4x36xf32>, vector<36x384xf32>, vector<4x384xf32> -> vector<4x384xf32>
    %c0_41 = arith.constant 0 : index
    %c0_42 = arith.constant 0 : index
    %c0_43 = arith.constant 0 : index
    %69 = vector.load %arg3[%c0_41, %c0_42, %c0_43] : memref<2x4x1xf32, #tpu.memory_space<vmem>>, vector<1x4x1xf32>
    %70 = vector.shape_cast %69 : vector<1x4x1xf32> to vector<4x1xf32>
    %71 = vector.broadcast %70 : vector<4x1xf32> to vector<4x384xf32>
    %72 = arith.addf %68, %71 : vector<4x384xf32>
    %cst_44 = arith.constant 5.000000e-01 : f32
    %73 = vector.broadcast %cst_44 : f32 to vector<4x384xf32>
    %74 = arith.mulf %73, %72 : vector<4x384xf32>
    %75 = arith.addf %5, %74 : vector<4x384xf32>
    %76 = arith.mulf %75, %37 : vector<4x384xf32>
    %cst_45 = arith.constant 0.000000e+00 : f32
    %77 = vector.broadcast %cst_45 : f32 to vector<4x384xf32>
    %78 = arith.maximumf %76, %77 : vector<4x384xf32>
    %c0_46 = arith.constant 0 : index
    %c128_47 = arith.constant 128 : index
    %79 = vector.load %arg5[%c0_46, %c128_47] : memref<4x640xf32, #tpu.memory_space<vmem>>, vector<4x384xf32>
    tpu.vector_store %arg5[%c0_46, %c128_47], %78 {strides = array<i32>} : memref<4x640xf32, #tpu.memory_space<vmem>>, vector<4x384xf32>,
    %c0_48 = arith.constant 0 : index
    %c111_49 = arith.constant 111 : index
    %80 = vector.load %arg5[%c0_48, %c111_49] : memref<4x640xf32, #tpu.memory_space<vmem>>, vector<4x384xf32>
    %81 = arith.mulf %80, %26 : vector<4x384xf32>
    %c0_50 = arith.constant 0 : index
    %c0_51 = arith.constant 0 : index
    %82 = vector.load %arg6[%c0_50, %c0_51] : memref<36x384xf32, #tpu.memory_space<vmem>>, vector<4x384xf32>
    tpu.vector_store %arg6[%c0_50, %c0_51], %81 {strides = array<i32>} : memref<36x384xf32, #tpu.memory_space<vmem>>, vector<4x384xf32>,
    %c0_52 = arith.constant 0 : index
    %c112_53 = arith.constant 112 : index
    %83 = vector.load %arg5[%c0_52, %c112_53] : memref<4x640xf32, #tpu.memory_space<vmem>>, vector<4x384xf32>
    %c4_54 = arith.constant 4 : index
    %c0_55 = arith.constant 0 : index
    %84 = vector.load %arg6[%c4_54, %c0_55] : memref<36x384xf32, #tpu.memory_space<vmem>>, vector<4x384xf32>
    tpu.vector_store %arg6[%c4_54, %c0_55], %83 {strides = array<i32>} : memref<36x384xf32, #tpu.memory_space<vmem>>, vector<4x384xf32>,
    %c0_56 = arith.constant 0 : index
    %c113_57 = arith.constant 113 : index
    %85 = vector.load %arg5[%c0_56, %c113_57] : memref<4x640xf32, #tpu.memory_space<vmem>>, vector<4x384xf32>
    %86 = arith.mulf %85, %30 : vector<4x384xf32>
    %c8_58 = arith.constant 8 : index
    %c0_59 = arith.constant 0 : index
    %87 = vector.load %arg6[%c8_58, %c0_59] : memref<36x384xf32, #tpu.memory_space<vmem>>, vector<4x384xf32>
    tpu.vector_store %arg6[%c8_58, %c0_59], %86 {strides = array<i32>} : memref<36x384xf32, #tpu.memory_space<vmem>>, vector<4x384xf32>,
    %c0_60 = arith.constant 0 : index
    %c127_61 = arith.constant 127 : index
    %88 = vector.load %arg5[%c0_60, %c127_61] : memref<4x640xf32, #tpu.memory_space<vmem>>, vector<4x384xf32>
    %89 = arith.mulf %88, %26 : vector<4x384xf32>
    %c12_62 = arith.constant 12 : index
    %c0_63 = arith.constant 0 : index
    %90 = vector.load %arg6[%c12_62, %c0_63] : memref<36x384xf32, #tpu.memory_space<vmem>>, vector<4x384xf32>
    tpu.vector_store %arg6[%c12_62, %c0_63], %89 {strides = array<i32>} : memref<36x384xf32, #tpu.memory_space<vmem>>, vector<4x384xf32>,
    %c0_64 = arith.constant 0 : index
    %c128_65 = arith.constant 128 : index
    %91 = vector.load %arg5[%c0_64, %c128_65] : memref<4x640xf32, #tpu.memory_space<vmem>>, vector<4x384xf32>
    %c16_66 = arith.constant 16 : index
    %c0_67 = arith.constant 0 : index
    %92 = vector.load %arg6[%c16_66, %c0_67] : memref<36x384xf32, #tpu.memory_space<vmem>>, vector<4x384xf32>
    tpu.vector_store %arg6[%c16_66, %c0_67], %91 {strides = array<i32>} : memref<36x384xf32, #tpu.memory_space<vmem>>, vector<4x384xf32>,
    %c0_68 = arith.constant 0 : index
    %c129_69 = arith.constant 129 : index
    %93 = vector.load %arg5[%c0_68, %c129_69] : memref<4x640xf32, #tpu.memory_space<vmem>>, vector<4x384xf32>
    %94 = arith.mulf %93, %30 : vector<4x384xf32>
    %c20_70 = arith.constant 20 : index
    %c0_71 = arith.constant 0 : index
    %95 = vector.load %arg6[%c20_70, %c0_71] : memref<36x384xf32, #tpu.memory_space<vmem>>, vector<4x384xf32>
    tpu.vector_store %arg6[%c20_70, %c0_71], %94 {strides = array<i32>} : memref<36x384xf32, #tpu.memory_space<vmem>>, vector<4x384xf32>,
    %c0_72 = arith.constant 0 : index
    %c143_73 = arith.constant 143 : index
    %96 = vector.load %arg5[%c0_72, %c143_73] : memref<4x640xf32, #tpu.memory_space<vmem>>, vector<4x384xf32>
    %97 = arith.mulf %96, %26 : vector<4x384xf32>
    %c24_74 = arith.constant 24 : index
    %c0_75 = arith.constant 0 : index
    %98 = vector.load %arg6[%c24_74, %c0_75] : memref<36x384xf32, #tpu.memory_space<vmem>>, vector<4x384xf32>
    tpu.vector_store %arg6[%c24_74, %c0_75], %97 {strides = array<i32>} : memref<36x384xf32, #tpu.memory_space<vmem>>, vector<4x384xf32>,
    %c0_76 = arith.constant 0 : index
    %c144_77 = arith.constant 144 : index
    %99 = vector.load %arg5[%c0_76, %c144_77] : memref<4x640xf32, #tpu.memory_space<vmem>>, vector<4x384xf32>
    %c28_78 = arith.constant 28 : index
    %c0_79 = arith.constant 0 : index
    %100 = vector.load %arg6[%c28_78, %c0_79] : memref<36x384xf32, #tpu.memory_space<vmem>>, vector<4x384xf32>
    tpu.vector_store %arg6[%c28_78, %c0_79], %99 {strides = array<i32>} : memref<36x384xf32, #tpu.memory_space<vmem>>, vector<4x384xf32>,
    %c0_80 = arith.constant 0 : index
    %c145_81 = arith.constant 145 : index
    %101 = vector.load %arg5[%c0_80, %c145_81] : memref<4x640xf32, #tpu.memory_space<vmem>>, vector<4x384xf32>
    %102 = arith.mulf %101, %30 : vector<4x384xf32>
    %c32_82 = arith.constant 32 : index
    %c0_83 = arith.constant 0 : index
    %103 = vector.load %arg6[%c32_82, %c0_83] : memref<36x384xf32, #tpu.memory_space<vmem>>, vector<4x384xf32>
    tpu.vector_store %arg6[%c32_82, %c0_83], %102 {strides = array<i32>} : memref<36x384xf32, #tpu.memory_space<vmem>>, vector<4x384xf32>,
    %c1 = arith.constant 1 : index
    %c0_84 = arith.constant 0 : index
    %c0_85 = arith.constant 0 : index
    %104 = vector.load %arg2[%c1, %c0_84, %c0_85] : memref<2x4x36xf32, #tpu.memory_space<vmem>>, vector<1x4x36xf32>
    %105 = vector.shape_cast %104 : vector<1x4x36xf32> to vector<4x36xf32>
    %c0_86 = arith.constant 0 : index
    %c0_87 = arith.constant 0 : index
    %106 = vector.load %arg6[%c0_86, %c0_87] : memref<36x384xf32, #tpu.memory_space<vmem>>, vector<36x384xf32>
    %cst_88 = arith.constant dense<0.000000e+00> : vector<4x384xf32>
    %107 = tpu.matmul %105, %106, %cst_88 {dimension_numbers = #tpu.dot_dimension_numbers<[1], [0], [0], [1], [0, 0, 1, 1], [], []>} : vector<4x36xf32>, vector<36x384xf32>, vector<4x384xf32> -> vector<4x384xf32>
    %c1_89 = arith.constant 1 : index
    %c0_90 = arith.constant 0 : index
    %c0_91 = arith.constant 0 : index
    %108 = vector.load %arg3[%c1_89, %c0_90, %c0_91] : memref<2x4x1xf32, #tpu.memory_space<vmem>>, vector<1x4x1xf32>
    %109 = vector.shape_cast %108 : vector<1x4x1xf32> to vector<4x1xf32>
    %110 = vector.broadcast %109 : vector<4x1xf32> to vector<4x384xf32>
    %111 = arith.addf %107, %110 : vector<4x384xf32>
    %cst_92 = arith.constant 5.000000e-01 : f32
    %112 = vector.broadcast %cst_92 : f32 to vector<4x384xf32>
    %113 = arith.mulf %112, %111 : vector<4x384xf32>
    %114 = arith.addf %76, %113 : vector<4x384xf32>
    %115 = arith.mulf %114, %37 : vector<4x384xf32>
    %116 = vector.extract_strided_slice %115 {offsets = [0, 16], sizes = [4, 256], strides = [1, 1]} : vector<4x384xf32> to vector<4x256xf32>
    %c0_93 = arith.constant 0 : index
    %c0_94 = arith.constant 0 : index
    %c0_95 = arith.constant 0 : index
    %117 = vector.load %arg4[%c0_93, %c0_94, %c0_95] : memref<1x4x256xf32, #tpu.memory_space<vmem>>, vector<1x4x256xf32>
    %118 = vector.shape_cast %117 : vector<1x4x256xf32> to vector<4x256xf32>
    %119 = vector.shape_cast %116 : vector<4x256xf32> to vector<1x4x256xf32>
    tpu.vector_store %arg4[%c0_93, %c0_94, %c0_95], %119 {strides = array<i32>} : memref<1x4x256xf32, #tpu.memory_space<vmem>>, vector<1x4x256xf32>,
    return
  }
  func.func @transform_0(%arg0: i32) -> (i32, i32, i32) {
    %c0_i32 = arith.constant 0 : i32
    %c0_i32_0 = arith.constant 0 : i32
    %c0_i32_1 = arith.constant 0 : i32
    return %arg0, %c0_i32, %c0_i32_0 : i32, i32, i32
  }
  func.func @transform_1(%arg0: i32) -> (i32, i32, i32) {
    %c0_i32 = arith.constant 0 : i32
    %c0_i32_0 = arith.constant 0 : i32
    %c0_i32_1 = arith.constant 0 : i32
    %c0_i32_2 = arith.constant 0 : i32
    return %c0_i32, %c0_i32_0, %c0_i32_1 : i32, i32, i32
  }
  func.func @transform_2(%arg0: i32) -> (i32, i32, i32) {
    %c0_i32 = arith.constant 0 : i32
    %c0_i32_0 = arith.constant 0 : i32
    %c0_i32_1 = arith.constant 0 : i32
    %c0_i32_2 = arith.constant 0 : i32
    return %c0_i32, %c0_i32_0, %c0_i32_1 : i32, i32, i32
  }
  func.func @transform_3(%arg0: i32) -> (i32, i32, i32) {
    %c0_i32 = arith.constant 0 : i32
    %c0_i32_0 = arith.constant 0 : i32
    %c0_i32_1 = arith.constant 0 : i32
    return %arg0, %c0_i32, %c0_i32_0 : i32, i32, i32
  }
}

</mosaic_0001>

<llo_original>
// kernel: resnet_stage_forward.1
$region0: #{resnet_stage_forward.1}
  #allocation0 [shape = 'u32[]', space=smem, size = 0x4, offset = 0x4, fixed_abs, tag = 'smem constant byte address 0x4 - core index']
  #allocation1 [shape = 'u32[144,128]{1,0:T(1,128)}', space=vmem, size = 0x12000, scoped, tag = 'internal scratch']
  #allocation2 [shape = 'f32[4,640]{1,0:T(4,128)}', space=vmem, size = 0x2800, scoped, tag = 'scratch operand']
  #allocation3 [shape = 'f32[36,384]{1,0:T(8,128)}', space=vmem, size = 0xf000, scoped, tag = 'scratch operand']
  %s0 = inlined_call_operand.vmem [shape: f32[2,4,256], index: 0, kind: input, shape index: {}]
  %s1 = inlined_call_operand.vmem [shape: f32[2,4,36], index: 1, kind: input, shape index: {}]
  %s2 = inlined_call_operand.vmem [shape: f32[2,4,1], index: 2, kind: input, shape index: {}]
  %s3 = inlined_call_operand.vmem [shape: f32[2,4,256], index: 3, kind: output, shape index: {}]
  %s4 = sld [smem:[#allocation0]]
  $region45: #{resnet_stage_forward.1} parent=0
    _
  %s6 = ssub.s32 1, %s4
  %s7 = scalar_select 0, %s6, %s4
  loop: start=0, step=1, limit=4
  $region2: #{resnet_stage_forward.1} parent=0 // loop_pre_header
    _
  $region3: #{resnet_stage_forward.1} parent=0 // loop_header
    %s9 = sphi 0, %s13
    %p10 = scmp.ge.s32.totalorder %s9, 4
    %s19 = sphi 0, %s21
    %s22 = sphi 0, %s19
    %s23 = sphi 0, %s22
    %s39 = sphi 0, %s23
    %s43 = sphi 0, %s43
    %s45 = sphi 0, %s43
    %s46 = sphi 0, %s45
    %s60 = sphi 0, %s46
    %s64 = sphi 0, %s64
    %s66 = sphi 0, %s64
    %s67 = sphi 0, %s66
    %s81 = sphi 0, %s67
    %s87 = sphi 0, %s89
    %s90 = sphi 0, %s87
    %s91 = sphi 0, %s90
    %s107 = sphi 0, %s91
  $region4: #{resnet_stage_forward.1} parent=0 // loop_header_branch
    %12 = sbr.rel (%p10) target = $region8
  $region5: #{resnet_stage_forward.1} parent=0 // loop_body
    %s14 = ssub.s32 %s9, 1
    %s15 = ssub.s32 %s9, 2
    %s16 = sadd.s32 %s9, 1
    %s17 = ssub.s32 %s9, %s16
    %p18 = scmp.eq.s32.totalorder %s17, 0
    %s20 = sadd.s32 %s19, 1
    %s21 = scalar_select %p18, %s19, %s20
    %p24 = pneg %p18
    %p25 = scmp.eq.s32.totalorder %s9, 1
    %p26 = por %p24, %p25
    %p27 = scmp.ne.s32.totalorder %s19, %s22
    %p28 = scmp.eq.s32.totalorder %s9, 0
    %p29 = por %p27, %p28
    %p30 = scmp.ne.s32.totalorder %s19, %s22
    %p31 = scmp.eq.s32.totalorder %s14, 1
    %p32 = por %p30, %p31
    %p33 = scmp.ne.s32.totalorder %s22, %s23
    %p34 = scmp.eq.s32.totalorder %s14, 0
    %p35 = por %p33, %p34
    %p36 = scmp.ne.s32.totalorder %s22, %s23
    %p37 = scmp.eq.s32.totalorder %s15, 1
    %p38 = por %p36, %p37
    %p40 = scmp.ne.s32.totalorder %s23, %s39
    %p41 = scmp.eq.s32.totalorder %s15, 0
    %p42 = por %p40, %p41
    %s44 = sadd.s32 %s43, 1
    %p47 = scmp.eq.s32.totalorder %s9, 1
    %p48 = scmp.ne.s32.totalorder %s43, %s45
    %p49 = scmp.eq.s32.totalorder %s9, 0
    %p50 = por %p48, %p49
    %p51 = scmp.ne.s32.totalorder %s43, %s45
    %p52 = scmp.eq.s32.totalorder %s14, 1
    %p53 = por %p51, %p52
    %p54 = scmp.ne.s32.totalorder %s45, %s46
    %p55 = scmp.eq.s32.totalorder %s14, 0
    %p56 = por %p54, %p55
    %p57 = scmp.ne.s32.totalorder %s45, %s46
    %p58 = scmp.eq.s32.totalorder %s15, 1
    %p59 = por %p57, %p58
    %p61 = scmp.ne.s32.totalorder %s46, %s60
    %p62 = scmp.eq.s32.totalorder %s15, 0
    %p63 = por %p61, %p62
    %s65 = sadd.s32 %s64, 1
    %p68 = scmp.eq.s32.totalorder %s9, 1
    %p69 = scmp.ne.s32.totalorder %s64, %s66
    %p70 = scmp.eq.s32.totalorder %s9, 0
    %p71 = por %p69, %p70
    %p72 = scmp.ne.s32.totalorder %s64, %s66
    %p73 = scmp.eq.s32.totalorder %s14, 1
    %p74 = por %p72, %p73
    %p75 = scmp.ne.s32.totalorder %s66, %s67
    %p76 = scmp.eq.s32.totalorder %s14, 0
    %p77 = por %p75, %p76
    %p78 = scmp.ne.s32.totalorder %s66, %s67
    %p79 = scmp.eq.s32.totalorder %s15, 1
    %p80 = por %p78, %p79
    %p82 = scmp.ne.s32.totalorder %s67, %s81
    %p83 = scmp.eq.s32.totalorder %s15, 0
    %p84 = por %p82, %p83
    %s85 = ssub.s32 %s9, %s16
    %p86 = scmp.eq.s32.totalorder %s85, 0
    %s88 = sadd.s32 %s87, 1
    %s89 = scalar_select %p86, %s87, %s88
    %p92 = pneg %p86
    %p93 = scmp.eq.s32.totalorder %s9, 1
    %p94 = por %p92, %p93
    %p95 = scmp.ne.s32.totalorder %s87, %s90
    %p96 = scmp.eq.s32.totalorder %s9, 0
    %p97 = por %p95, %p96
    %p98 = scmp.ne.s32.totalorder %s87, %s90
    %p99 = scmp.eq.s32.totalorder %s14, 1
    %p100 = por %p98, %p99
    %p101 = scmp.ne.s32.totalorder %s90, %s91
    %p102 = scmp.eq.s32.totalorder %s14, 0
    %p103 = por %p101, %p102
    %p104 = scmp.ne.s32.totalorder %s90, %s91
    %p105 = scmp.eq.s32.totalorder %s15, 1
    %p106 = por %p104, %p105
    %p108 = scmp.ne.s32.totalorder %s91, %s107
    %p109 = scmp.eq.s32.totalorder %s15, 0
    %p110 = por %p108, %p109
    %p111 = scmp.le.s32.totalorder 1, %s9
    %p112 = scmp.lt.s32.totalorder %s9, 3
    %p113 = pnand %p111, %p112
    %p114 = pneg %p113
    // Predicated region
    $region9: #{resnet_stage_forward.1} parent=5 // pred_check
      _
    $region10: #{resnet_stage_forward.1} parent=5 // pred_check_branch
      %116 = sbr.rel (%p113) target = $region12
    $region11: #{resnet_stage_forward.1} parent=5 // pred_region
      %s117 = ssub.s32 %s9, 1
      // Predicated region
      $region13: #{resnet_stage_forward.1} parent=11 // pred_check
        %p118 = pneg %p56
      $region14: #{resnet_stage_forward.1} parent=11 // pred_check_branch
        %120 = sbr.rel (%p118) target = $region16
      $region15: #{resnet_stage_forward.1} parent=11 // pred_region
        _
      $region16: #{resnet_stage_forward.1} parent=11 // pred_fallthru
        _
      // Predicated region
      $region17: #{resnet_stage_forward.1} parent=11 // pred_check
        %p121 = pneg %p77
      $region18: #{resnet_stage_forward.1} parent=11 // pred_check_branch
        %123 = sbr.rel (%p121) target = $region20
      $region19: #{resnet_stage_forward.1} parent=11 // pred_region
        _
      $region20: #{resnet_stage_forward.1} parent=11 // pred_fallthru
        _
    $region12: #{resnet_stage_forward.1} parent=5 // pred_fallthru
      _
    %p124 = scmp.lt.s32.totalorder %s9, 2
    // Predicated region
    $region21: #{resnet_stage_forward.1} parent=5 // pred_check
      %p125 = pneg %p124
    $region22: #{resnet_stage_forward.1} parent=5 // pred_check_branch
      %127 = sbr.rel (%p125) target = $region24
    $region23: #{resnet_stage_forward.1} parent=5 // pred_region
      // Predicated region
      $region25: #{resnet_stage_forward.1} parent=23 // pred_check
        %p128 = pneg %p29
      $region26: #{resnet_stage_forward.1} parent=23 // pred_check_branch
        %130 = sbr.rel (%p128) target = $region28
      $region27: #{resnet_stage_forward.1} parent=23 // pred_region
        %p131 = scmp.lt.s32.totalorder %s9, 1
        %s132 = scalar_select %p131, %s9, 1
        %s133 = smul.addr %s132, 2
        %s134 = smul.addr %s133, 4
        %s135 = scalar_lea.vmem %s0, %s134
      $region28: #{resnet_stage_forward.1} parent=23 // pred_fallthru
        _
    $region24: #{resnet_stage_forward.1} parent=5 // pred_fallthru
      _
    %p136 = scmp.le.s32.totalorder 1, %s9
    %p137 = scmp.lt.s32.totalorder %s9, 3
    %p138 = pnand %p136, %p137
    %p139 = pneg %p138
    // Predicated region
    $region29: #{resnet_stage_forward.1} parent=5 // pred_check
      _
    $region30: #{resnet_stage_forward.1} parent=5 // pred_check_branch
      %141 = sbr.rel (%p138) target = $region32
    $region31: #{resnet_stage_forward.1} parent=5 // pred_region
      %s142 = ssub.s32 %s9, 1
      %p143 = scmp.lt.s32.totalorder %s14, 1
      %s144 = scalar_select %p143, %s14, 1
      %s145 = smul.addr %s144, 2
      %s146 = smul.addr %s145, 4
      %s147 = scalar_lea.vmem %s0, %s146
      %p148 = pneg %p35
      %p149 = pneg %p32
      %p150 = pneg %p56
      %p151 = pneg %p53
      %p152 = pneg %p77
      %p153 = pneg %p74
      %p154 = pneg %p103
      %p155 = pneg %p100
      %p156 = scmp.lt.s32.totalorder %s14, 1
      %s157 = scalar_select %p156, %s14, 1
      %s158 = smul.addr %s157, 2
      %s159 = smul.addr %s158, 4
      %s160 = scalar_lea.vmem %s3, %s159
      %p161 = scmp.lt.s32.totalorder %s14, 1
      %s162 = scalar_select %p161, %s14, 1
      %s163 = smul.addr %s162, 2
      %s164 = smul.addr %s163, 4
      %s165 = scalar_lea.vmem %s0, %s164
      %p166 = scmp.lt.s32.totalorder %s14, 1
      %s167 = scalar_select %p166, %s14, 1
      %s168 = smul.addr %s167, 2
      %s169 = smul.addr %s168, 4
      %s170 = scalar_lea.vmem %s3, %s169
      %171 = vst [vmem:[#allocation2] sm:$0xff] 0.0
      %172 = vst [vmem:[#allocation2 + $0x8] sm:$0xff] 0.0
      %173 = vst [vmem:[#allocation2 + $0x10] sm:$0xf] 0.0
      %v174 = vld [vmem:[%s165] sm:$0xff]
      %175 = vst [vmem:[#allocation2 + $0x4] sm:$0xff] %v174
      %v176 = vld [vmem:[#allocation2] sm:$0xff]
      %v177 = vld [vmem:[#allocation2 + $0x8] sm:$0xff]
      %v178 = vlaneseq
      %v179 = vand.u32 %v178, 127
      %v180 = vadd.s32 %v179, 128
      %v181 = vadd.s32 %v179, 256
      %vm182 = vcmp.lt.s32.totalorder %v179, 0
      %v183 = vsub.s32 0, %v179
      %v184 = vsel %vm182, %v183, %v179
      %v185 = vshrl.u32 %v184, 4
      %v186 = vand.u32 %v184, 15
      %v187 = vsub.s32 0, %v186
      %v188 = vsel %vm182, %v187, %v186
      %vm189 = vcmp.lt.s32.totalorder %v180, 0
      %v190 = vsub.s32 0, %v180
      %v191 = vsel %vm189, %v190, %v180
      %v192 = vshrl.u32 %v191, 4
      %v193 = vand.u32 %v191, 15
      %v194 = vsub.s32 0, %v193
      %v195 = vsel %vm189, %v194, %v193
      %vm196 = vcmp.lt.s32.totalorder %v181, 0
      %v197 = vsub.s32 0, %v181
      %v198 = vsel %vm196, %v197, %v181
      %v199 = vshrl.u32 %v198, 4
      %v200 = vand.u32 %v198, 15
      %v201 = vsub.s32 0, %v200
      %v202 = vsel %vm196, %v201, %v200
      %vm203 = vcmp.ne.s32.totalorder %v188, 0
      %vm204 = vcmp.ne.s32.totalorder %v195, 0
      %vm205 = vcmp.ne.s32.totalorder %v202, 0
      %vm206 = vcmp.lt.s32.totalorder %v188, 0
      %vm207 = vcmp.lt.s32.totalorder %v195, 0
      %vm208 = vcmp.lt.s32.totalorder %v202, 0
      %vm209 = vmand %vm206, %vm203
      %vm210 = vmand %vm207, %vm204
      %vm211 = vmand %vm208, %vm205
      %v212 = vadd.s32 %v188, 16
      %v213 = vadd.s32 %v195, 16
      %v214 = vadd.s32 %v202, 16
      %v215 = vsel %vm209, %v212, %v188
      %v216 = vsel %vm210, %v213, %v195
      %v217 = vsel %vm211, %v214, %v202
      %vm218 = vcmp.ne.s32.totalorder %v215, 0
      %vm219 = vcmp.ne.s32.totalorder %v216, 0
      %vm220 = vcmp.ne.s32.totalorder %v217, 0
      %v221 = vsel %vm218, 1, 0
      %v222 = vsel %vm219, 1, 0
      %v223 = vsel %vm220, 1, 0
      %v224 = vcvt.s32.f32 %v221
      %v225 = vcvt.s32.f32 %v222
      %v226 = vcvt.s32.f32 %v223
      %vm227 = vcmp.ne.s32.totalorder %v215, 15
      %vm228 = vcmp.ne.s32.totalorder %v216, 15
      %vm229 = vcmp.ne.s32.totalorder %v217, 15
      %v230 = vsel %vm227, 1, 0
      %v231 = vsel %vm228, 1, 0
      %v232 = vsel %vm229, 1, 0
      %v233 = vcvt.s32.f32 %v230
      %v234 = vcvt.s32.f32 %v231
      %v235 = vcvt.s32.f32 %v232
      %vm236 = vcmp.ge.s32.totalorder %v179, 16
      %vm237 = vcmp.ge.s32.totalorder %v180, 16
      %vm238 = vcmp.ge.s32.totalorder %v181, 16
      %vm239 = vcmp.lt.s32.totalorder %v179, 272
      %vm240 = vcmp.lt.s32.totalorder %v180, 272
      %vm241 = vcmp.lt.s32.totalorder %v181, 272
      %vm242 = vmand %vm236, %vm239
      %vm243 = vmand %vm237, %vm240
      %vm244 = vmand %vm238, %vm241
      %v245 = vsel %vm242, 1, 0
      %v246 = vsel %vm243, 1, 0
      %v247 = vsel %vm244, 1, 0
      %v248 = vcvt.s32.f32 %v245
      %v249 = vcvt.s32.f32 %v246
      %v250 = vcvt.s32.f32 %v247
      %v251 = vmax.f32 %v176, 0.0
      %v252 = vmax.f32 %v177, 0.0
      %255 = vrot.lane.b32.xlu0 %v251, 16
      %v256 = vpop.permute.xlu0 %255
      %257 = vrot.lane.b32.xlu0 %v252, 16
      %v258 = vpop.permute.xlu0 %257
      %v259 = vrot.slane %v256, 4
      %v260 = vrot.slane %v258, 4
      %vm261 = vcmask 1043456
      %v262 = vsel %vm261, %v259, %v260
      %vm263 = vcmask 130048
      %v264 = vsel %vm263, %v256, %v262
      %v265 = vsel %vm263, %v258, %v260
      %268 = vst [vmem:[#allocation2 + $0x4] sm:$0xff] %v264
      %269 = vst [vmem:[#allocation2 + $0xc] sm:$0xf] %v265
      %v270 = vld [vmem:[#allocation2] sm:$0xff]
      %v271 = vld [vmem:[#allocation2 + $0x8] sm:$0xff]
      %v275 = vcombine.low %v224, %v225
      %276 = vrot.lane.b32.xlu0 %v275, 111
      %v277 = vpop.permute.xlu0 %276
      %278 = vrot.lane.b32.xlu0 %v226, 111
      %v279 = vpop.permute.xlu0 %278
      %v280 = vrot.slane %v277, 4
      %v281 = vrot.slane %v279, 4
      %vm282 = vcmask 908288
      %v283 = vsel %vm282, %v280, %v277
      %v284 = vsel %vm261, %v280, %v281
      %v285 = vsel %vm282, %v284, %v279
      %v288 = vmul.f32 %v270, %v283
      %v289 = vmul.f32 %v271, %v285
      %v292 = vcombine.high %v288, %v288
      %v293 = vcombine.high %v289, %v289
      %294 = vrot.lane.b32.xlu0 %v288, 17
      %v295 = vpop.permute.xlu0 %294
      %296 = vrot.lane.b32.xlu0 %v292, 17
      %v297 = vpop.permute.xlu0 %296
      %298 = vrot.lane.b32.xlu0 %v289, 17
      %v299 = vpop.permute.xlu0 %298
      %300 = vrot.lane.b32.xlu0 %v293, 17
      %v301 = vpop.permute.xlu0 %300
      %vm302 = vcmask 138240
      %v303 = vsel %vm302, %v295, %v297
      %v304 = vsel %vm302, %v297, %v299
      %v305 = vsel %vm302, %v299, %v301
      %309 = vst [vmem:[#allocation3] sm:$0xf] %v303
      %310 = vst [vmem:[#allocation3 + $0x8] sm:$0xf] %v304
      %311 = vst [vmem:[#allocation3 + $0x10] sm:$0xf] %v305
      %v312 = vld [vmem:[#allocation2] sm:$0xff]
      %v313 = vld [vmem:[#allocation2 + $0x8] sm:$0xff]
      %v316 = vcombine.low %v312, %v312
      %v317 = vcombine.low %v313, %v313
      %318 = vrot.lane.b32.xlu0 %v316, 16
      %v319 = vpop.permute.xlu0 %318
      %320 = vrot.lane.b32.xlu0 %v312, 16
      %v321 = vpop.permute.xlu0 %320
      %322 = vrot.lane.b32.xlu0 %v317, 16
      %v323 = vpop.permute.xlu0 %322
      %324 = vrot.lane.b32.xlu0 %v313, 16
      %v325 = vpop.permute.xlu0 %324
      %v326 = vsel %vm263, %v319, %v321
      %v327 = vsel %vm263, %v321, %v323
      %v328 = vsel %vm263, %v323, %v325
      %332 = vst [vmem:[#allocation3] sm:$0xf0] %v326
      %333 = vst [vmem:[#allocation3 + $0x8] sm:$0xf0] %v327
      %334 = vst [vmem:[#allocation3 + $0x10] sm:$0xf0] %v328
      %v335 = vld [vmem:[#allocation2] sm:$0xff]
      %v336 = vld [vmem:[#allocation2 + $0x8] sm:$0xff]
      %v340 = vcombine.low %v233, %v234
      %341 = vrot.lane.b32.xlu0 %v340, 113
      %v342 = vpop.permute.xlu0 %341
      %343 = vrot.lane.b32.xlu0 %v235, 113
      %v344 = vpop.permute.xlu0 %343
      %v345 = vrot.slane %v342, 4
      %v346 = vrot.slane %v344, 4
      %vm347 = vcmask 924672
      %v348 = vsel %vm347, %v345, %v342
      %v349 = vsel %vm261, %v345, %v346
      %v350 = vsel %vm347, %v349, %v344
      %v353 = vmul.f32 %v335, %v348
      %v354 = vmul.f32 %v336, %v350
      %v357 = vcombine.high %v353, %v353
      %v358 = vcombine.high %v354, %v354
      %359 = vrot.lane.b32.xlu0 %v353, 15
      %v360 = vpop.permute.xlu0 %359
      %361 = vrot.lane.b32.xlu0 %v357, 15
      %v362 = vpop.permute.xlu0 %361
      %363 = vrot.lane.b32.xlu0 %v354, 15
      %v364 = vpop.permute.xlu0 %363
      %365 = vrot.lane.b32.xlu0 %v358, 15
      %v366 = vpop.permute.xlu0 %365
      %vm367 = vcmask 121856
      %v368 = vsel %vm367, %v360, %v362
      %v369 = vsel %vm367, %v362, %v364
      %v370 = vsel %vm367, %v364, %v366
      %374 = vst [vmem:[#allocation3 + $0x18] sm:$0xf] %v368
      %375 = vst [vmem:[#allocation3 + $0x20] sm:$0xf] %v369
      %376 = vst [vmem:[#allocation3 + $0x28] sm:$0xf] %v370
      %v377 = vld [vmem:[#allocation2] sm:$0xff]
      %v378 = vld [vmem:[#allocation2 + $0x8] sm:$0xff]
      %379 = vrot.lane.b32.xlu0 %v275, 127
      %v380 = vpop.permute.xlu0 %379
      %381 = vrot.lane.b32.xlu0 %v226, 127
      %v382 = vpop.permute.xlu0 %381
      %v383 = vrot.slane %v380, 4
      %v384 = vrot.slane %v382, 4
      %vm385 = vcmask 1039360
      %v386 = vsel %vm385, %v383, %v380
      %v387 = vsel %vm261, %v383, %v384
      %v388 = vsel %vm385, %v387, %v382
      %v391 = vmul.f32 %v377, %v386
      %v392 = vmul.f32 %v378, %v388
      %v395 = vcombine.low %v391, %v391
      %v396 = vcombine.low %v392, %v392
      %397 = vrot.lane.b32.xlu0 %v395, 1
      %v398 = vpop.permute.xlu0 %397
      %399 = vrot.lane.b32.xlu0 %v391, 1
      %v400 = vpop.permute.xlu0 %399
      %401 = vrot.lane.b32.xlu0 %v396, 1
      %v402 = vpop.permute.xlu0 %401
      %403 = vrot.lane.b32.xlu0 %v392, 1
      %v404 = vpop.permute.xlu0 %403
      %vm405 = vcmask 7168
      %v406 = vsel %vm405, %v398, %v400
      %v407 = vsel %vm405, %v400, %v402
      %v408 = vsel %vm405, %v402, %v404
      %412 = vst [vmem:[#allocation3 + $0x18] sm:$0xf0] %v406
      %413 = vst [vmem:[#allocation3 + $0x20] sm:$0xf0] %v407
      %414 = vst [vmem:[#allocation3 + $0x28] sm:$0xf0] %v408
      %v415 = vld [vmem:[#allocation2 + $0x4] sm:$0xff]
      %v416 = vld [vmem:[#allocation2 + $0xc] sm:$0xf]
      %v418 = vcombine.high %v415, %v415
      %420 = vst [vmem:[#allocation3 + $0x30] sm:$0xf] %v415
      %421 = vst [vmem:[#allocation3 + $0x38] sm:$0xf] %v418
      %422 = vst [vmem:[#allocation3 + $0x40] sm:$0xf] %v416
      %v423 = vld [vmem:[#allocation2 + $0x4] sm:$0xff]
      %v424 = vld [vmem:[#allocation2 + $0xc] sm:$0xff]
      %425 = vrot.lane.b32.xlu0 %v340, 1
      %v426 = vpop.permute.xlu0 %425
      %427 = vrot.lane.b32.xlu0 %v235, 1
      %v428 = vpop.permute.xlu0 %427
      %v429 = vrot.slane %v426, 4
      %v430 = vrot.slane %v428, 4
      %v431 = vsel %vm405, %v429, %v426
      %v432 = vsel %vm261, %v429, %v430
      %v433 = vsel %vm405, %v432, %v428
      %v436 = vmul.f32 %v423, %v431
      %v437 = vmul.f32 %v424, %v433
      %v440 = vcombine.low %v436, %v436
      %v441 = vcombine.low %v437, %v437
      %442 = vrot.lane.b32.xlu0 %v440, 127
      %v443 = vpop.permute.xlu0 %442
      %444 = vrot.lane.b32.xlu0 %v436, 127
      %v445 = vpop.permute.xlu0 %444
      %446 = vrot.lane.b32.xlu0 %v441, 127
      %v447 = vpop.permute.xlu0 %446
      %448 = vrot.lane.b32.xlu0 %v437, 127
      %v449 = vpop.permute.xlu0 %448
      %v450 = vsel %vm385, %v443, %v445
      %v451 = vsel %vm385, %v445, %v447
      %v452 = vsel %vm385, %v447, %v449
      %456 = vst [vmem:[#allocation3 + $0x30] sm:$0xf0] %v450
      %457 = vst [vmem:[#allocation3 + $0x38] sm:$0xf0] %v451
      %458 = vst [vmem:[#allocation3 + $0x40] sm:$0xf0] %v452
      %v459 = vld [vmem:[#allocation2 + $0x4] sm:$0xff]
      %v460 = vld [vmem:[#allocation2 + $0xc] sm:$0xff]
      %461 = vrot.lane.b32.xlu0 %v275, 15
      %v462 = vpop.permute.xlu0 %461
      %463 = vrot.lane.b32.xlu0 %v226, 15
      %v464 = vpop.permute.xlu0 %463
      %v465 = vrot.slane %v462, 4
      %v466 = vrot.slane %v464, 4
      %v467 = vsel %vm367, %v465, %v462
      %v468 = vsel %vm261, %v465, %v466
      %v469 = vsel %vm367, %v468, %v464
      %v472 = vmul.f32 %v459, %v467
      %v473 = vmul.f32 %v460, %v469
      %v476 = vcombine.high %v472, %v472
      %v477 = vcombine.high %v473, %v473
      %478 = vrot.lane.b32.xlu0 %v472, 113
      %v479 = vpop.permute.xlu0 %478
      %480 = vrot.lane.b32.xlu0 %v476, 113
      %v481 = vpop.permute.xlu0 %480
      %482 = vrot.lane.b32.xlu0 %v473, 113
      %v483 = vpop.permute.xlu0 %482
      %484 = vrot.lane.b32.xlu0 %v477, 113
      %v485 = vpop.permute.xlu0 %484
      %v486 = vsel %vm347, %v479, %v481
      %v487 = vsel %vm347, %v481, %v483
      %v488 = vsel %vm347, %v483, %v485
      %492 = vst [vmem:[#allocation3 + $0x48] sm:$0xf] %v486
      %493 = vst [vmem:[#allocation3 + $0x50] sm:$0xf] %v487
      %494 = vst [vmem:[#allocation3 + $0x58] sm:$0xf] %v488
      %v495 = vld [vmem:[#allocation2 + $0x4] sm:$0xff]
      %v496 = vld [vmem:[#allocation2 + $0xc] sm:$0xff]
      %v499 = vcombine.low %v495, %v495
      %v500 = vcombine.low %v496, %v496
      %501 = vrot.lane.b32.xlu0 %v499, 112
      %v502 = vpop.permute.xlu0 %501
      %503 = vrot.lane.b32.xlu0 %v495, 112
      %v504 = vpop.permute.xlu0 %503
      %505 = vrot.lane.b32.xlu0 %v500, 112
      %v506 = vpop.permute.xlu0 %505
      %507 = vrot.lane.b32.xlu0 %v496, 112
      %v508 = vpop.permute.xlu0 %507
      %vm509 = vcmask 916480
      %v510 = vsel %vm509, %v502, %v504
      %v511 = vsel %vm509, %v504, %v506
      %v512 = vsel %vm509, %v506, %v508
      %516 = vst [vmem:[#allocation3 + $0x48] sm:$0xf0] %v510
      %517 = vst [vmem:[#allocation3 + $0x50] sm:$0xf0] %v511
      %518 = vst [vmem:[#allocation3 + $0x58] sm:$0xf0] %v512
      %v519 = vld [vmem:[#allocation2 + $0x4] sm:$0xff]
      %v520 = vld [vmem:[#allocation2 + $0xc] sm:$0xff]
      %521 = vrot.lane.b32.xlu0 %v340, 17
      %v522 = vpop.permute.xlu0 %521
      %523 = vrot.lane.b32.xlu0 %v235, 17
      %v524 = vpop.permute.xlu0 %523
      %v525 = vrot.slane %v522, 4
      %v526 = vrot.slane %v524, 4
      %v527 = vsel %vm302, %v525, %v522
      %v528 = vsel %vm261, %v525, %v526
      %v529 = vsel %vm302, %v528, %v524
      %v532 = vmul.f32 %v519, %v527
      %v533 = vmul.f32 %v520, %v529
      %v536 = vcombine.high %v532, %v532
      %v537 = vcombine.high %v533, %v533
      %538 = vrot.lane.b32.xlu0 %v532, 111
      %v539 = vpop.permute.xlu0 %538
      %540 = vrot.lane.b32.xlu0 %v536, 111
      %v541 = vpop.permute.xlu0 %540
      %542 = vrot.lane.b32.xlu0 %v533, 111
      %v543 = vpop.permute.xlu0 %542
      %544 = vrot.lane.b32.xlu0 %v537, 111
      %v545 = vpop.permute.xlu0 %544
      %v546 = vsel %vm282, %v539, %v541
      %v547 = vsel %vm282, %v541, %v543
      %v548 = vsel %vm282, %v543, %v545
      %552 = vst [vmem:[#allocation3 + $0x60] sm:$0xf] %v546
      %553 = vst [vmem:[#allocation3 + $0x68] sm:$0xf] %v547
      %554 = vst [vmem:[#allocation3 + $0x70] sm:$0xf] %v548
      %v555 = vld [vmem:[%s1] sm:$0xf]
      %v556 = vld [vmem:[#allocation3] sm:$0xff]
      %v557 = vld [vmem:[#allocation3 + $0x8] sm:$0xff]
      %v558 = vld [vmem:[#allocation3 + $0x10] sm:$0xff]
      %v559 = vld [vmem:[#allocation3 + $0x18] sm:$0xff]
      %v560 = vld [vmem:[#allocation3 + $0x20] sm:$0xff]
      %v561 = vld [vmem:[#allocation3 + $0x28] sm:$0xff]
      %v562 = vld [vmem:[#allocation3 + $0x30] sm:$0xff]
      %v563 = vld [vmem:[#allocation3 + $0x38] sm:$0xff]
      %v564 = vld [vmem:[#allocation3 + $0x40] sm:$0xff]
      %v565 = vld [vmem:[#allocation3 + $0x48] sm:$0xff]
      %v566 = vld [vmem:[#allocation3 + $0x50] sm:$0xff]
      %v567 = vld [vmem:[#allocation3 + $0x58] sm:$0xff]
      %v568 = vld [vmem:[#allocation3 + $0x60] sm:$0xf]
      %v569 = vld [vmem:[#allocation3 + $0x68] sm:$0xf]
      %v570 = vld [vmem:[#allocation3 + $0x70] sm:$0xf]
      %v571 = vld [vmem:[%s2] sm:$0xf]
      %573 = vset.pattern.permute.xlu0 0
      %574 = vperm.xlu0 %573, %v571
      %v575 = vpop.permute.xlu0 %574
      %vm577 = vcmask 293888
      %v579 = vsel %vm577, %v555, 0
      %v582 = vsel %vm261, %v568, 0
      %v585 = vsel %vm261, %v569, 0
      %v588 = vsel %vm261, %v570, 0
      %590 = vmatprep.subr.mxu0 0.0
      %591 = vmatpush1.msra.mxu0 0.0
      %592 = vmatprep.subr.mxu0 0.0
      %593 = vmatpush1.msra.mxu0 0.0
      %594 = vmatprep.subr.mxu0 0.0
      %595 = vmatpush1.msra.mxu0 0.0
      %596 = vmatprep.subr.mxu0 0.0
      %597 = vmatpush1.msra.mxu0 0.0
      %598 = vmatprep.subr.mxu0 0.0
      %599 = vmatpush1.msra.mxu0 0.0
      %600 = vmatprep.subr.mxu0 0.0
      %601 = vmatpush1.msra.mxu0 0.0
      %602 = vmatprep.subr.mxu0 0.0
      %603 = vmatpush1.msra.mxu0 0.0
      %604 = vmatprep.subr.mxu0 0.0
      %605 = vmatpush1.msra.mxu0 0.0
      %606 = vmatprep.subr.mxu0 0.0
      %607 = vmatpush1.msra.mxu0 0.0
      %608 = vmatprep.subr.mxu0 0.0
      %609 = vmatpush1.msra.mxu0 0.0
      %610 = vmatprep.subr.mxu0 0.0
      %611 = vmatpush1.msra.mxu0 0.0
      %612 = vmatprep.subr.mxu0 %v585
      %613 = vmatpush1.msra.mxu0 %v582
      %614 = vmatprep.subr.mxu0 %v566
      %615 = vmatpush1.msra.mxu0 %v565
      %616 = vmatprep.subr.mxu0 %v563
      %617 = vmatpush1.msra.mxu0 %v562
      %618 = vmatprep.subr.mxu0 %v560
      %619 = vmatpush1.msra.mxu0 %v559
      %620 = vmatprep.subr.mxu0 %v557
      %621 = vmatpush1.msra.mxu0 %v556
      %622 = vmatprep.subr.mxu0 0.0
      %623 = vmatpush2.msra.mxu0 0.0
      %624 = vmatprep.subr.mxu0 0.0
      %625 = vmatpush2.msra.mxu0 0.0
      %626 = vmatprep.subr.mxu0 0.0
      %627 = vmatpush2.msra.mxu0 0.0
      %628 = vmatprep.subr.mxu0 0.0
      %629 = vmatpush2.msra.mxu0 0.0
      %630 = vmatprep.subr.mxu0 0.0
      %631 = vmatpush2.msra.mxu0 0.0
      %632 = vmatprep.subr.mxu0 0.0
      %633 = vmatpush2.msra.mxu0 0.0
      %634 = vmatprep.subr.mxu0 0.0
      %635 = vmatpush2.msra.mxu0 0.0
      %636 = vmatprep.subr.mxu0 0.0
      %637 = vmatpush2.msra.mxu0 0.0
      %638 = vmatprep.subr.mxu0 0.0
      %639 = vmatpush2.msra.mxu0 0.0
      %640 = vmatprep.subr.mxu0 0.0
      %641 = vmatpush2.msra.mxu0 0.0
      %642 = vmatprep.subr.mxu0 0.0
      %643 = vmatpush2.msra.mxu0 0.0
      %644 = vmatprep.subr.mxu0 0.0
      %645 = vmatpush2.msra.mxu0 0.0
      %646 = vmatprep.subr.mxu0 0.0
      %647 = vmatpush2.msra.mxu0 0.0
      %648 = vmatprep.subr.mxu0 0.0
      %649 = vmatpush2.msra.mxu0 0.0
      %650 = vmatprep.subr.mxu0 0.0
      %651 = vmatpush2.msra.mxu0 0.0
      %652 = vmatprep.subr.mxu0 0.0
      %653 = vmatpush2.msra.mxu0 0.0
      %654 = vmatprep.mubr.f32.mxu0 0.0
      %655 = vmatmul.mubr.f32.gmra.mxu0 %v579
      %v656 = vpop.f32.mrf.mxu0
      %v657 = vadd.f32 %v575, %v656
      %v658 = vpop.f32.mrf.mxu0
      %v659 = vadd.f32 %v575, %v658
      %660 = vdwg.mxu0
      %661 = vmatprep.subr.mxu0 0.0
      %662 = vmatpush1.msra.mxu0 0.0
      %663 = vmatprep.subr.mxu0 0.0
      %664 = vmatpush1.msra.mxu0 0.0
      %665 = vmatprep.subr.mxu0 0.0
      %666 = vmatpush1.msra.mxu0 0.0
      %667 = vmatprep.subr.mxu0 0.0
      %668 = vmatpush1.msra.mxu0 0.0
      %669 = vmatprep.subr.mxu0 0.0
      %670 = vmatpush1.msra.mxu0 0.0
      %671 = vmatprep.subr.mxu0 0.0
      %672 = vmatpush1.msra.mxu0 0.0
      %673 = vmatprep.subr.mxu0 0.0
      %674 = vmatpush1.msra.mxu0 0.0
      %675 = vmatprep.subr.mxu0 0.0
      %676 = vmatpush1.msra.mxu0 0.0
      %677 = vmatprep.subr.mxu0 0.0
      %678 = vmatpush1.msra.mxu0 0.0
      %679 = vmatprep.subr.mxu0 0.0
      %680 = vmatpush1.msra.mxu0 0.0
      %681 = vmatprep.subr.mxu0 0.0
      %682 = vmatpush1.msra.mxu0 0.0
      %683 = vmatprep.subr.mxu0 0.0
      %684 = vmatpush1.msra.mxu0 %v588
      %685 = vmatprep.subr.mxu0 0.0
      %686 = vmatpush1.msra.mxu0 %v567
      %687 = vmatprep.subr.mxu0 0.0
      %688 = vmatpush1.msra.mxu0 %v564
      %689 = vmatprep.subr.mxu0 0.0
      %690 = vmatpush1.msra.mxu0 %v561
      %691 = vmatprep.subr.mxu0 0.0
      %692 = vmatpush1.msra.mxu0 %v558
      %693 = vmatprep.subr.mxu0 0.0
      %694 = vmatpush2.msra.mxu0 0.0
      %695 = vmatprep.subr.mxu0 0.0
      %696 = vmatpush2.msra.mxu0 0.0
      %697 = vmatprep.subr.mxu0 0.0
      %698 = vmatpush2.msra.mxu0 0.0
      %699 = vmatprep.subr.mxu0 0.0
      %700 = vmatpush2.msra.mxu0 0.0
      %701 = vmatprep.subr.mxu0 0.0
      %702 = vmatpush2.msra.mxu0 0.0
      %703 = vmatprep.subr.mxu0 0.0
      %704 = vmatpush2.msra.mxu0 0.0
      %705 = vmatprep.subr.mxu0 0.0
      %706 = vmatpush2.msra.mxu0 0.0
      %707 = vmatprep.subr.mxu0 0.0
      %708 = vmatpush2.msra.mxu0 0.0
      %709 = vmatprep.subr.mxu0 0.0
      %710 = vmatpush2.msra.mxu0 0.0
      %711 = vmatprep.subr.mxu0 0.0
      %712 = vmatpush2.msra.mxu0 0.0
      %713 = vmatprep.subr.mxu0 0.0
      %714 = vmatpush2.msra.mxu0 0.0
      %715 = vmatprep.subr.mxu0 0.0
      %716 = vmatpush2.msra.mxu0 0.0
      %717 = vmatprep.subr.mxu0 0.0
      %718 = vmatpush2.msra.mxu0 0.0
      %719 = vmatprep.subr.mxu0 0.0
      %720 = vmatpush2.msra.mxu0 0.0
      %721 = vmatprep.subr.mxu0 0.0
      %722 = vmatpush2.msra.mxu0 0.0
      %723 = vmatprep.subr.mxu0 0.0
      %724 = vmatpush2.msra.mxu0 0.0
      %725 = vmatprep.mubr.f32.mxu0 0.0
      %726 = vmatmul.mubr.f32.gmra.mxu0 %v579
      %v727 = vpop.f32.mrf.mxu0
      %v728 = vadd.f32 %v575, %v727
      %v729 = vpop.f32.mrf.mxu0
      %730 = vdwg.mxu0
      %v731 = vmul.f32 %v657, 0.5
      %v732 = vmul.f32 %v659, 0.5
      %v733 = vmul.f32 %v728, 0.5
      %v737 = vcombine.low %v731, %v732
      %738 = vrot.lane.b32.xlu0 %v737, 112
      %v739 = vpop.permute.xlu0 %738
      %740 = vrot.lane.b32.xlu0 %v733, 112
      %v741 = vpop.permute.xlu0 %740
      %v742 = vrot.slane %v739, 4
      %v743 = vrot.slane %v741, 4
      %v744 = vsel %vm509, %v742, %v739
      %v745 = vsel %vm261, %v742, %v743
      %v746 = vsel %vm509, %v745, %v741
      %v749 = vadd.f32 %v176, %v744
      %v750 = vadd.f32 %v177, %v746
      %v754 = vcombine.low %v248, %v249
      %755 = vrot.lane.b32.xlu0 %v754, 112
      %v756 = vpop.permute.xlu0 %755
      %757 = vrot.lane.b32.xlu0 %v250, 112
      %v758 = vpop.permute.xlu0 %757
      %v759 = vrot.slane %v756, 4
      %v760 = vrot.slane %v758, 4
      %v761 = vsel %vm509, %v759, %v756
      %v762 = vsel %vm261, %v759, %v760
      %v763 = vsel %vm509, %v762, %v758
      %v766 = vmul.f32 %v749, %v761
      %v767 = vmul.f32 %v750, %v763
      %v768 = vmax.f32 %v766, 0.0
      %v769 = vmax.f32 %v767, 0.0
      %772 = vrot.lane.b32.xlu0 %v768, 16
      %v773 = vpop.permute.xlu0 %772
      %774 = vrot.lane.b32.xlu0 %v769, 16
      %v775 = vpop.permute.xlu0 %774
      %v776 = vrot.slane %v773, 4
      %v777 = vrot.slane %v775, 4
      %v778 = vsel %vm261, %v776, %v777
      %v779 = vsel %vm263, %v773, %v778
      %v780 = vsel %vm263, %v775, %v777
      %783 = vst [vmem:[#allocation2 + $0x4] sm:$0xff] %v779
      %784 = vst [vmem:[#allocation2 + $0xc] sm:$0xf] %v780
      %v785 = vld [vmem:[#allocation2] sm:$0xff]
      %v786 = vld [vmem:[#allocation2 + $0x8] sm:$0xff]
      %v787 = vmul.f32 %v785, %v283
      %v788 = vmul.f32 %v786, %v285
      %v791 = vcombine.high %v787, %v787
      %v792 = vcombine.high %v788, %v788
      %793 = vrot.lane.b32.xlu0 %v787, 17
      %v794 = vpop.permute.xlu0 %793
      %795 = vrot.lane.b32.xlu0 %v791, 17
      %v796 = vpop.permute.xlu0 %795
      %797 = vrot.lane.b32.xlu0 %v788, 17
      %v798 = vpop.permute.xlu0 %797
      %799 = vrot.lane.b32.xlu0 %v792, 17
      %v800 = vpop.permute.xlu0 %799
      %v801 = vsel %vm302, %v794, %v796
      %v802 = vsel %vm302, %v796, %v798
      %v803 = vsel %vm302, %v798, %v800
      %807 = vst [vmem:[#allocation3] sm:$0xf] %v801
      %808 = vst [vmem:[#allocation3 + $0x8] sm:$0xf] %v802
      %809 = vst [vmem:[#allocation3 + $0x10] sm:$0xf] %v803
      %v810 = vld [vmem:[#allocation2] sm:$0xff]
      %v811 = vld [vmem:[#allocation2 + $0x8] sm:$0xff]
      %v814 = vcombine.low %v810, %v810
      %v815 = vcombine.low %v811, %v811
      %816 = vrot.lane.b32.xlu0 %v814, 16
      %v817 = vpop.permute.xlu0 %816
      %818 = vrot.lane.b32.xlu0 %v810, 16
      %v819 = vpop.permute.xlu0 %818
      %820 = vrot.lane.b32.xlu0 %v815, 16
      %v821 = vpop.permute.xlu0 %820
      %822 = vrot.lane.b32.xlu0 %v811, 16
      %v823 = vpop.permute.xlu0 %822
      %v824 = vsel %vm263, %v817, %v819
      %v825 = vsel %vm263, %v819, %v821
      %v826 = vsel %vm263, %v821, %v823
      %830 = vst [vmem:[#allocation3] sm:$0xf0] %v824
      %831 = vst [vmem:[#allocation3 + $0x8] sm:$0xf0] %v825
      %832 = vst [vmem:[#allocation3 + $0x10] sm:$0xf0] %v826
      %v833 = vld [vmem:[#allocation2] sm:$0xff]
      %v834 = vld [vmem:[#allocation2 + $0x8] sm:$0xff]
      %v835 = vmul.f32 %v833, %v348
      %v836 = vmul.f32 %v834, %v350
      %v839 = vcombine.high %v835, %v835
      %v840 = vcombine.high %v836, %v836
      %841 = vrot.lane.b32.xlu0 %v835, 15
      %v842 = vpop.permute.xlu0 %841
      %843 = vrot.lane.b32.xlu0 %v839, 15
      %v844 = vpop.permute.xlu0 %843
      %845 = vrot.lane.b32.xlu0 %v836, 15
      %v846 = vpop.permute.xlu0 %845
      %847 = vrot.lane.b32.xlu0 %v840, 15
      %v848 = vpop.permute.xlu0 %847
      %v849 = vsel %vm367, %v842, %v844
      %v850 = vsel %vm367, %v844, %v846
      %v851 = vsel %vm367, %v846, %v848
      %855 = vst [vmem:[#allocation3 + $0x18] sm:$0xf] %v849
      %856 = vst [vmem:[#allocation3 + $0x20] sm:$0xf] %v850
      %857 = vst [vmem:[#allocation3 + $0x28] sm:$0xf] %v851
      %v858 = vld [vmem:[#allocation2] sm:$0xff]
      %v859 = vld [vmem:[#allocation2 + $0x8] sm:$0xff]
      %v860 = vmul.f32 %v858, %v386
      %v861 = vmul.f32 %v859, %v388
      %v864 = vcombine.low %v860, %v860
      %v865 = vcombine.low %v861, %v861
      %866 = vrot.lane.b32.xlu0 %v864, 1
      %v867 = vpop.permute.xlu0 %866
      %868 = vrot.lane.b32.xlu0 %v860, 1
      %v869 = vpop.permute.xlu0 %868
      %870 = vrot.lane.b32.xlu0 %v865, 1
      %v871 = vpop.permute.xlu0 %870
      %872 = vrot.lane.b32.xlu0 %v861, 1
      %v873 = vpop.permute.xlu0 %872
      %v874 = vsel %vm405, %v867, %v869
      %v875 = vsel %vm405, %v869, %v871
      %v876 = vsel %vm405, %v871, %v873
      %880 = vst [vmem:[#allocation3 + $0x18] sm:$0xf0] %v874
      %881 = vst [vmem:[#allocation3 + $0x20] sm:$0xf0] %v875
      %882 = vst [vmem:[#allocation3 + $0x28] sm:$0xf0] %v876
      %v883 = vld [vmem:[#allocation2 + $0x4] sm:$0xff]
      %v884 = vld [vmem:[#allocation2 + $0xc] sm:$0xf]
      %v886 = vcombine.high %v883, %v883
      %888 = vst [vmem:[#allocation3 + $0x30] sm:$0xf] %v883
      %889 = vst [vmem:[#allocation3 + $0x38] sm:$0xf] %v886
      %890 = vst [vmem:[#allocation3 + $0x40] sm:$0xf] %v884
      %v891 = vld [vmem:[#allocation2 + $0x4] sm:$0xff]
      %v892 = vld [vmem:[#allocation2 + $0xc] sm:$0xff]
      %v893 = vmul.f32 %v891, %v431
      %v894 = vmul.f32 %v892, %v433
      %v897 = vcombine.low %v893, %v893
      %v898 = vcombine.low %v894, %v894
      %899 = vrot.lane.b32.xlu0 %v897, 127
      %v900 = vpop.permute.xlu0 %899
      %901 = vrot.lane.b32.xlu0 %v893, 127
      %v902 = vpop.permute.xlu0 %901
      %903 = vrot.lane.b32.xlu0 %v898, 127
      %v904 = vpop.permute.xlu0 %903
      %905 = vrot.lane.b32.xlu0 %v894, 127
      %v906 = vpop.permute.xlu0 %905
      %v907 = vsel %vm385, %v900, %v902
      %v908 = vsel %vm385, %v902, %v904
      %v909 = vsel %vm385, %v904, %v906
      %913 = vst [vmem:[#allocation3 + $0x30] sm:$0xf0] %v907
      %914 = vst [vmem:[#allocation3 + $0x38] sm:$0xf0] %v908
      %915 = vst [vmem:[#allocation3 + $0x40] sm:$0xf0] %v909
      %v916 = vld [vmem:[#allocation2 + $0x4] sm:$0xff]
      %v917 = vld [vmem:[#allocation2 + $0xc] sm:$0xff]
      %v918 = vmul.f32 %v916, %v467
      %v919 = vmul.f32 %v917, %v469
      %v922 = vcombine.high %v918, %v918
      %v923 = vcombine.high %v919, %v919
      %924 = vrot.lane.b32.xlu0 %v918, 113
      %v925 = vpop.permute.xlu0 %924
      %926 = vrot.lane.b32.xlu0 %v922, 113
      %v927 = vpop.permute.xlu0 %926
      %928 = vrot.lane.b32.xlu0 %v919, 113
      %v929 = vpop.permute.xlu0 %928
      %930 = vrot.lane.b32.xlu0 %v923, 113
      %v931 = vpop.permute.xlu0 %930
      %v932 = vsel %vm347, %v925, %v927
      %v933 = vsel %vm347, %v927, %v929
      %v934 = vsel %vm347, %v929, %v931
      %938 = vst [vmem:[#allocation3 + $0x48] sm:$0xf] %v932
      %939 = vst [vmem:[#allocation3 + $0x50] sm:$0xf] %v933
      %940 = vst [vmem:[#allocation3 + $0x58] sm:$0xf] %v934
      %v941 = vld [vmem:[#allocation2 + $0x4] sm:$0xff]
      %v942 = vld [vmem:[#allocation2 + $0xc] sm:$0xff]
      %v945 = vcombine.low %v941, %v941
      %v946 = vcombine.low %v942, %v942
      %947 = vrot.lane.b32.xlu0 %v945, 112
      %v948 = vpop.permute.xlu0 %947
      %949 = vrot.lane.b32.xlu0 %v941, 112
      %v950 = vpop.permute.xlu0 %949
      %951 = vrot.lane.b32.xlu0 %v946, 112
      %v952 = vpop.permute.xlu0 %951
      %953 = vrot.lane.b32.xlu0 %v942, 112
      %v954 = vpop.permute.xlu0 %953
      %v955 = vsel %vm509, %v948, %v950
      %v956 = vsel %vm509, %v950, %v952
      %v957 = vsel %vm509, %v952, %v954
      %961 = vst [vmem:[#allocation3 + $0x48] sm:$0xf0] %v955
      %962 = vst [vmem:[#allocation3 + $0x50] sm:$0xf0] %v956
      %963 = vst [vmem:[#allocation3 + $0x58] sm:$0xf0] %v957
      %v964 = vld [vmem:[#allocation2 + $0x4] sm:$0xff]
      %v965 = vld [vmem:[#allocation2 + $0xc] sm:$0xff]
      %v966 = vmul.f32 %v964, %v527
      %v967 = vmul.f32 %v965, %v529
      %v970 = vcombine.high %v966, %v966
      %v971 = vcombine.high %v967, %v967
      %972 = vrot.lane.b32.xlu0 %v966, 111
      %v973 = vpop.permute.xlu0 %972
      %974 = vrot.lane.b32.xlu0 %v970, 111
      %v975 = vpop.permute.xlu0 %974
      %976 = vrot.lane.b32.xlu0 %v967, 111
      %v977 = vpop.permute.xlu0 %976
      %978 = vrot.lane.b32.xlu0 %v971, 111
      %v979 = vpop.permute.xlu0 %978
      %v980 = vsel %vm282, %v973, %v975
      %v981 = vsel %vm282, %v975, %v977
      %v982 = vsel %vm282, %v977, %v979
      %986 = vst [vmem:[#allocation3 + $0x60] sm:$0xf] %v980
      %987 = vst [vmem:[#allocation3 + $0x68] sm:$0xf] %v981
      %988 = vst [vmem:[#allocation3 + $0x70] sm:$0xf] %v982
      %s989 = scalar_lea.vmem %s1, 4
      %v990 = vld [vmem:[%s989] sm:$0xf]
      %v991 = vld [vmem:[#allocation3] sm:$0xff]
      %v992 = vld [vmem:[#allocation3 + $0x8] sm:$0xff]
      %v993 = vld [vmem:[#allocation3 + $0x10] sm:$0xff]
      %v994 = vld [vmem:[#allocation3 + $0x18] sm:$0xff]
      %v995 = vld [vmem:[#allocation3 + $0x20] sm:$0xff]
      %v996 = vld [vmem:[#allocation3 + $0x28] sm:$0xff]
      %v997 = vld [vmem:[#allocation3 + $0x30] sm:$0xff]
      %v998 = vld [vmem:[#allocation3 + $0x38] sm:$0xff]
      %v999 = vld [vmem:[#allocation3 + $0x40] sm:$0xff]
      %v1000 = vld [vmem:[#allocation3 + $0x48] sm:$0xff]
      %v1001 = vld [vmem:[#allocation3 + $0x50] sm:$0xff]
      %v1002 = vld [vmem:[#allocation3 + $0x58] sm:$0xff]
      %v1003 = vld [vmem:[#allocation3 + $0x60] sm:$0xf]
      %v1004 = vld [vmem:[#allocation3 + $0x68] sm:$0xf]
      %v1005 = vld [vmem:[#allocation3 + $0x70] sm:$0xf]
      %s1006 = scalar_lea.vmem %s2, 4
      %v1007 = vld [vmem:[%s1006] sm:$0xf]
      %1009 = vset.pattern.permute.xlu0 0
      %1010 = vperm.xlu0 %1009, %v1007
      %v1011 = vpop.permute.xlu0 %1010
      %v1014 = vsel %vm577, %v990, 0
      %v1017 = vsel %vm261, %v1003, 0
      %v1020 = vsel %vm261, %v1004, 0
      %v1023 = vsel %vm261, %v1005, 0
      %1025 = vmatprep.subr.mxu0 0.0
      %1026 = vmatpush1.msra.mxu0 0.0
      %1027 = vmatprep.subr.mxu0 0.0
      %1028 = vmatpush1.msra.mxu0 0.0
      %1029 = vmatprep.subr.mxu0 0.0
      %1030 = vmatpush1.msra.mxu0 0.0
      %1031 = vmatprep.subr.mxu0 0.0
      %1032 = vmatpush1.msra.mxu0 0.0
      %1033 = vmatprep.subr.mxu0 0.0
      %1034 = vmatpush1.msra.mxu0 0.0
      %1035 = vmatprep.subr.mxu0 0.0
      %1036 = vmatpush1.msra.mxu0 0.0
      %1037 = vmatprep.subr.mxu0 0.0
      %1038 = vmatpush1.msra.mxu0 0.0
      %1039 = vmatprep.subr.mxu0 0.0
      %1040 = vmatpush1.msra.mxu0 0.0
      %1041 = vmatprep.subr.mxu0 0.0
      %1042 = vmatpush1.msra.mxu0 0.0
      %1043 = vmatprep.subr.mxu0 0.0
      %1044 = vmatpush1.msra.mxu0 0.0
      %1045 = vmatprep.subr.mxu0 0.0
      %1046 = vmatpush1.msra.mxu0 0.0
      %1047 = vmatprep.subr.mxu0 %v1020
      %1048 = vmatpush1.msra.mxu0 %v1017
      %1049 = vmatprep.subr.mxu0 %v1001
      %1050 = vmatpush1.msra.mxu0 %v1000
      %1051 = vmatprep.subr.mxu0 %v998
      %1052 = vmatpush1.msra.mxu0 %v997
      %1053 = vmatprep.subr.mxu0 %v995
      %1054 = vmatpush1.msra.mxu0 %v994
      %1055 = vmatprep.subr.mxu0 %v992
      %1056 = vmatpush1.msra.mxu0 %v991
      %1057 = vmatprep.subr.mxu0 0.0
      %1058 = vmatpush2.msra.mxu0 0.0
      %1059 = vmatprep.subr.mxu0 0.0
      %1060 = vmatpush2.msra.mxu0 0.0
      %1061 = vmatprep.subr.mxu0 0.0
      %1062 = vmatpush2.msra.mxu0 0.0
      %1063 = vmatprep.subr.mxu0 0.0
      %1064 = vmatpush2.msra.mxu0 0.0
      %1065 = vmatprep.subr.mxu0 0.0
      %1066 = vmatpush2.msra.mxu0 0.0
      %1067 = vmatprep.subr.mxu0 0.0
      %1068 = vmatpush2.msra.mxu0 0.0
      %1069 = vmatprep.subr.mxu0 0.0
      %1070 = vmatpush2.msra.mxu0 0.0
      %1071 = vmatprep.subr.mxu0 0.0
      %1072 = vmatpush2.msra.mxu0 0.0
      %1073 = vmatprep.subr.mxu0 0.0
      %1074 = vmatpush2.msra.mxu0 0.0
      %1075 = vmatprep.subr.mxu0 0.0
      %1076 = vmatpush2.msra.mxu0 0.0
      %1077 = vmatprep.subr.mxu0 0.0
      %1078 = vmatpush2.msra.mxu0 0.0
      %1079 = vmatprep.subr.mxu0 0.0
      %1080 = vmatpush2.msra.mxu0 0.0
      %1081 = vmatprep.subr.mxu0 0.0
      %1082 = vmatpush2.msra.mxu0 0.0
      %1083 = vmatprep.subr.mxu0 0.0
      %1084 = vmatpush2.msra.mxu0 0.0
      %1085 = vmatprep.subr.mxu0 0.0
      %1086 = vmatpush2.msra.mxu0 0.0
      %1087 = vmatprep.subr.mxu0 0.0
      %1088 = vmatpush2.msra.mxu0 0.0
      %1089 = vmatprep.mubr.f32.mxu0 0.0
      %1090 = vmatmul.mubr.f32.gmra.mxu0 %v1014
      %v1091 = vpop.f32.mrf.mxu0
      %v1092 = vadd.f32 %v1011, %v1091
      %v1093 = vpop.f32.mrf.mxu0
      %v1094 = vadd.f32 %v1011, %v1093
      %1095 = vdwg.mxu0
      %1096 = vmatprep.subr.mxu0 0.0
      %1097 = vmatpush1.msra.mxu0 0.0
      %1098 = vmatprep.subr.mxu0 0.0
      %1099 = vmatpush1.msra.mxu0 0.0
      %1100 = vmatprep.subr.mxu0 0.0
      %1101 = vmatpush1.msra.mxu0 0.0
      %1102 = vmatprep.subr.mxu0 0.0
      %1103 = vmatpush1.msra.mxu0 0.0
      %1104 = vmatprep.subr.mxu0 0.0
      %1105 = vmatpush1.msra.mxu0 0.0
      %1106 = vmatprep.subr.mxu0 0.0
      %1107 = vmatpush1.msra.mxu0 0.0
      %1108 = vmatprep.subr.mxu0 0.0
      %1109 = vmatpush1.msra.mxu0 0.0
      %1110 = vmatprep.subr.mxu0 0.0
      %1111 = vmatpush1.msra.mxu0 0.0
      %1112 = vmatprep.subr.mxu0 0.0
      %1113 = vmatpush1.msra.mxu0 0.0
      %1114 = vmatprep.subr.mxu0 0.0
      %1115 = vmatpush1.msra.mxu0 0.0
      %1116 = vmatprep.subr.mxu0 0.0
      %1117 = vmatpush1.msra.mxu0 0.0
      %1118 = vmatprep.subr.mxu0 0.0
      %1119 = vmatpush1.msra.mxu0 %v1023
      %1120 = vmatprep.subr.mxu0 0.0
      %1121 = vmatpush1.msra.mxu0 %v1002
      %1122 = vmatprep.subr.mxu0 0.0
      %1123 = vmatpush1.msra.mxu0 %v999
      %1124 = vmatprep.subr.mxu0 0.0
      %1125 = vmatpush1.msra.mxu0 %v996
      %1126 = vmatprep.subr.mxu0 0.0
      %1127 = vmatpush1.msra.mxu0 %v993
      %1128 = vmatprep.subr.mxu0 0.0
      %1129 = vmatpush2.msra.mxu0 0.0
      %1130 = vmatprep.subr.mxu0 0.0
      %1131 = vmatpush2.msra.mxu0 0.0
      %1132 = vmatprep.subr.mxu0 0.0
      %1133 = vmatpush2.msra.mxu0 0.0
      %1134 = vmatprep.subr.mxu0 0.0
      %1135 = vmatpush2.msra.mxu0 0.0
      %1136 = vmatprep.subr.mxu0 0.0
      %1137 = vmatpush2.msra.mxu0 0.0
      %1138 = vmatprep.subr.mxu0 0.0
      %1139 = vmatpush2.msra.mxu0 0.0
      %1140 = vmatprep.subr.mxu0 0.0
      %1141 = vmatpush2.msra.mxu0 0.0
      %1142 = vmatprep.subr.mxu0 0.0
      %1143 = vmatpush2.msra.mxu0 0.0
      %1144 = vmatprep.subr.mxu0 0.0
      %1145 = vmatpush2.msra.mxu0 0.0
      %1146 = vmatprep.subr.mxu0 0.0
      %1147 = vmatpush2.msra.mxu0 0.0
      %1148 = vmatprep.subr.mxu0 0.0
      %1149 = vmatpush2.msra.mxu0 0.0
      %1150 = vmatprep.subr.mxu0 0.0
      %1151 = vmatpush2.msra.mxu0 0.0
      %1152 = vmatprep.subr.mxu0 0.0
      %1153 = vmatpush2.msra.mxu0 0.0
      %1154 = vmatprep.subr.mxu0 0.0
      %1155 = vmatpush2.msra.mxu0 0.0
      %1156 = vmatprep.subr.mxu0 0.0
      %1157 = vmatpush2.msra.mxu0 0.0
      %1158 = vmatprep.subr.mxu0 0.0
      %1159 = vmatpush2.msra.mxu0 0.0
      %1160 = vmatprep.mubr.f32.mxu0 0.0
      %1161 = vmatmul.mubr.f32.gmra.mxu0 %v1014
      %v1162 = vpop.f32.mrf.mxu0
      %v1163 = vadd.f32 %v1011, %v1162
      %v1164 = vpop.f32.mrf.mxu0
      %1165 = vdwg.mxu0
      %v1166 = vmul.f32 %v1092, 0.5
      %v1167 = vmul.f32 %v1094, 0.5
      %v1168 = vmul.f32 %v1163, 0.5
      %v1172 = vcombine.low %v1166, %v1167
      %1173 = vrot.lane.b32.xlu0 %v1172, 112
      %v1174 = vpop.permute.xlu0 %1173
      %1175 = vrot.lane.b32.xlu0 %v1168, 112
      %v1176 = vpop.permute.xlu0 %1175
      %v1177 = vrot.slane %v1174, 4
      %v1178 = vrot.slane %v1176, 4
      %v1179 = vsel %vm509, %v1177, %v1174
      %v1180 = vsel %vm261, %v1177, %v1178
      %v1181 = vsel %vm509, %v1180, %v1176
      %v1184 = vadd.f32 %v766, %v1179
      %v1185 = vadd.f32 %v767, %v1181
      %v1186 = vmul.f32 %v1184, %v761
      %v1187 = vmul.f32 %v1185, %v763
      %v1190 = vrot.slane %v1186, 4
      %v1191 = vrot.slane %v1187, 4
      %v1192 = vsel %vm261, %v1190, %v1191
      %1194 = vst [vmem:[%s170] sm:$0xff] %v1192
      %p1195 = scmp.lt.s32.totalorder %s14, 1
      %s1196 = scalar_select %p1195, %s14, 1
      %s1197 = smul.addr %s1196, 2
      %s1198 = smul.addr %s1197, 4
      %s1199 = scalar_lea.vmem %s3, %s1198
      // Predicated region
      $region33: #{resnet_stage_forward.1} parent=31 // pred_check
        %p1200 = pneg %p100
      $region34: #{resnet_stage_forward.1} parent=31 // pred_check_branch
        %1202 = sbr.rel (%p1200) target = $region36
      $region35: #{resnet_stage_forward.1} parent=31 // pred_region
        _
      $region36: #{resnet_stage_forward.1} parent=31 // pred_fallthru
        _
    $region32: #{resnet_stage_forward.1} parent=5 // pred_fallthru
      _
    %p1203 = scmp.le.s32.totalorder 2, %s9
    // Predicated region
    $region37: #{resnet_stage_forward.1} parent=5 // pred_check
      %p1204 = pneg %p1203
    $region38: #{resnet_stage_forward.1} parent=5 // pred_check_branch
      %1206 = sbr.rel (%p1204) target = $region40
    $region39: #{resnet_stage_forward.1} parent=5 // pred_region
      %s1207 = ssub.s32 %s9, 2
      // Predicated region
      $region41: #{resnet_stage_forward.1} parent=39 // pred_check
        %p1208 = pneg %p106
      $region42: #{resnet_stage_forward.1} parent=39 // pred_check_branch
        %1210 = sbr.rel (%p1208) target = $region44
      $region43: #{resnet_stage_forward.1} parent=39 // pred_region
        %p1211 = scmp.lt.s32.totalorder %s15, 1
        %s1212 = scalar_select %p1211, %s15, 1
        %s1213 = smul.addr %s1212, 2
        %s1214 = smul.addr %s1213, 4
        %s1215 = scalar_lea.vmem %s3, %s1214
      $region44: #{resnet_stage_forward.1} parent=39 // pred_fallthru
        _
    $region40: #{resnet_stage_forward.1} parent=5 // pred_fallthru
      _
  $region6: #{resnet_stage_forward.1} parent=0 // loop_footer
    %s13 = sadd.s32 1, %s9
  $region7: #{resnet_stage_forward.1} parent=0 // loop_footer_branch
    %8 = sbr.rel target = $region3
  $region8: #{resnet_stage_forward.1} parent=0 // loop_exit
    _

</llo_original>
